<compile_context>
chip_gen: v5e
topology: v5e:2x2
jax: 0.10.0
libtpu: 0.0.40
codegen_flags: <defaults>
</compile_context>

<pallas_src>
import math

import numpy as np
import jax
import jax.numpy as jnp
from jax.experimental import pallas as pl
from jax.experimental.pallas import tpu as pltpu

LAMBDA_XY = 0.5
LAMBDA_WH = 2.5
LAMBDA_CONF = 1.0
LAMBDA_CLS = 1.0
IGNORE_THRESHOLD = 0.5
LANES = 128
LOG_CLAMP = 100.0  # PyTorch BCELoss clamps log outputs at -100.


# ----------------------------------------------------------------------------
# Pallas kernel: dense no-object confidence BCE over every grid cell.
#   per-cell contribution = 0.5 * lambda_conf * min(softplus(p), 100)
# p_ref is (tm, 128) confidence logits (128 cells per lane row; padded cells
# hold -1e4 so softplus == 0 exactly).  The (8, 128) output block is resident
# across the reduction axis; each tile is sublane-reduced in-register first.
# ----------------------------------------------------------------------------
def _noobj_conf_kernel(p_ref, out_ref):
    @pl.when(pl.program_id(1) == 0)
    def _():
        out_ref[...] = jnp.zeros_like(out_ref)

    p = p_ref[...]                                          # (tm, 128) f32
    # Stable softplus: 1 exp + 1 log per element (both EUP), no sigmoid needed.
    sp = jnp.maximum(p, 0.0) + jnp.log(1.0 + jnp.exp(-jnp.abs(p)))
    contrib = (0.5 * LAMBDA_CONF) * jnp.minimum(sp, LOG_CLAMP)
    # Sublane-grouped reduction (tile-aligned reshape, pure VPU add tree):
    # (tm, 128) -> (tm//8, 8, 128) -> (8, 128)
    red = jnp.sum(contrib.reshape(contrib.shape[0] // 8, 8, LANES), axis=0)
    out_ref[...] += red


# ----------------------------------------------------------------------------
# Host-side glue: bbox IoU + target encoding (mirrors the PyTorch code).
# ----------------------------------------------------------------------------
def bbox_iou_np(box1, box2, eps=1e-9):
    b1_x1, b1_x2 = box1[:, 0] - box1[:, 2] / 2, box1[:, 0] + box1[:, 2] / 2
    b1_y1, b1_y2 = box1[:, 1] - box1[:, 3] / 2, box1[:, 1] + box1[:, 3] / 2
    b2_x1, b2_x2 = box2[:, 0] - box2[:, 2] / 2, box2[:, 0] + box2[:, 2] / 2
    b2_y1, b2_y2 = box2[:, 1] - box2[:, 3] / 2, box2[:, 1] + box2[:, 3] / 2
    inter = (np.clip(np.minimum(b1_x2, b2_x2) - np.maximum(b1_x1, b2_x1), 0, None)
             * np.clip(np.minimum(b1_y2, b2_y2) - np.maximum(b1_y1, b2_y1), 0, None))
    w1, h1 = b1_x2 - b1_x1, b1_y2 - b1_y1 + eps
    w2, h2 = b2_x2 - b2_x1, b2_y2 - b2_y1 + eps
    union = w1 * h1 + w2 * h2 - inter + eps
    return inter / union


def encode_target_np(target, anchors, layer_w, layer_h, ignore_threshold,
                     num_anchors, num_classes):
    B = target.shape[0]
    shp = (B, num_anchors, layer_h, layer_w)
    mask = np.zeros(shp, np.float32)
    noobj = np.ones(shp, np.float32)
    tx = np.zeros(shp, np.float32)
    ty = np.zeros(shp, np.float32)
    tw = np.zeros(shp, np.float32)
    th = np.zeros(shp, np.float32)
    tconf = np.zeros(shp, np.float32)
    tcls = np.zeros(shp + (num_classes,), np.float32)
    anchors = np.asarray(anchors, np.float32)
    for b in range(B):
        for t in range(target.shape[1]):
            if target[b, t].sum() <= 0:
                continue
            gx = target[b, t, 0] * layer_w
            gy = target[b, t, 1] * layer_h
            gw = target[b, t, 2] * layer_w
            gh = target[b, t, 3] * layer_h
            gi = int(gx)
            gj = int(gy)
            gt_box = np.array([[0.0, 0.0, gw, gh]], np.float32)
            anchor_shapes = np.concatenate(
                (np.zeros((num_anchors, 2), np.float32), anchors), 1)
            calc_iou = bbox_iou_np(gt_box, anchor_shapes)
            noobj[b, calc_iou > ignore_threshold, gj, gi] = 0
            best_n = int(np.argmax(calc_iou))
            mask[b, best_n, gj, gi] = 1
            tx[b, best_n, gj, gi] = gx - gi
            ty[b, best_n, gj, gi] = gy - gj
            tw[b, best_n, gj, gi] = math.log(gw / anchors[best_n][0] + 1e-16)
            th[b, best_n, gj, gi] = math.log(gh / anchors[best_n][1] + 1e-16)
            tconf[b, best_n, gj, gi] = 1
            tcls[b, best_n, gj, gi, int(target[b, t, 4])] = 1
    return mask, noobj, tx, ty, tw, th, tconf, tcls


def _round_up(a, b):
    return ((a + b - 1) // b) * b


def _cdiv(a, b):
    return (a + b - 1) // b


def _sp_clamped(x):
    # min(-log(1 - sigmoid(x)), 100) == min(softplus(x), 100)  (stable form)
    return jnp.minimum(jax.nn.softplus(x), LOG_CLAMP)


# ----------------------------------------------------------------------------
# Wrapper: dense conf-BCE kernel + sparse per-object corrections in JAX.
# ----------------------------------------------------------------------------
def yolo_loss_pallas(pred, target, cfg, anchors, *, tm=2048):
    pred = jnp.asarray(pred, jnp.float32)
    B, C_in, H, W = pred.shape
    A = len(anchors)
    NC = cfg["classes"]
    attrs = 5 + NC
    assert C_in == A * attrs

    stride_h = cfg["input_size"] / H
    stride_w = cfg["input_size"] / W
    scaled_anchors = [(aw / stride_w, ah / stride_h) for aw, ah in anchors]

    # Host-side target encoding (data-dependent per-box scatter).
    mask, noobj, tx, ty, tw, th, tconf, tcls = encode_target_np(
        np.asarray(target), scaled_anchors, W, H, IGNORE_THRESHOLD, A, NC)

    # ---------------- dense part: no-object conf BCE over every cell ---------
    M = B * A * H * W                    # total grid cells
    rows = _cdiv(M, LANES)               # 128 cells per lane row
    rows8 = _round_up(max(rows, 1), 8)

    # Two TensorCores (v7x) only when each core gets >= 2 tiles of pipelined
    # work; split rows evenly instead of padding a whole zero tile.
    G = 2 if rows8 >= 4 * tm else 1
    per_core = _round_up(_cdiv(rows8, G), 8)
    S = _cdiv(per_core, tm)
    tm_eff = _round_up(_cdiv(per_core, S), 8)
    per_core = S * tm_eff
    rows_pad = G * per_core

    pred_r = pred.reshape(B, A, attrs, H, W)
    conf_flat = pred_r[:, :, 4, :, :].reshape(-1)           # (M,) conf logits
    # Pad with a very negative logit so softplus(pad) == 0 exactly.
    conf_flat = jnp.pad(conf_flat, (0, rows_pad * LANES - M),
                        constant_values=-1e4)
    conf_slab = conf_flat.reshape(rows_pad, LANES)

    # VMEM: 2 buffers x tm_eff x 128 x 4B input + (8,128) accumulator (+slack).
    vmem_limit = int(max(8 << 20, 4 * tm_eff * LANES * 4))

    # NOTE(v5e): if profiling shows exposed DMA, add
    # pipeline_mode=pl.Buffered(3) on the input BlockSpec and sweep 2 vs 3.
    partial = pl.pallas_call(
        _noobj_conf_kernel,
        out_shape=jax.ShapeDtypeStruct((G * 8, LANES), jnp.float32),
        grid_spec=pltpu.PrefetchScalarGridSpec(
            num_scalar_prefetch=0,
            grid=(G, S),
            in_specs=[pl.BlockSpec((tm_eff, LANES),
                                   lambda g, s: (g * S + s, 0))],
            out_specs=pl.BlockSpec((8, LANES), lambda g, s: (g, 0)),
        ),
        compiler_params=pltpu.CompilerParams(
            dimension_semantics=("parallel", "arbitrary"),
            vmem_limit_bytes=vmem_limit),
    )(conf_slab)
    loss = jnp.sum(partial)

    # ---------------- sparse corrections (<= B*T*A cells; plain JAX) ---------
    # Cells whose noobj_mask was zeroed (ignore-threshold / best anchors):
    # subtract the dense no-object BCE the kernel added for them.
    nb_idx = np.nonzero(noobj == 0)
    if nb_idx[0].size:
        bn, an, jn, in_ = (jnp.asarray(v) for v in nb_idx)
        pc = pred_r[bn, an, 4, jn, in_]                      # (Nn,)
        loss = loss - (0.5 * LAMBDA_CONF) * jnp.sum(_sp_clamped(pc))

    # Object cells (mask == 1): xy/wh MSE, object conf BCE, class BCE.
    ob_idx = np.nonzero(mask == 1)
    if ob_idx[0].size:
        bo, ao, jo, io = (jnp.asarray(v) for v in ob_idx)
        p_cell = pred_r[bo, ao, :, jo, io]                   # (No, attrs)
        t_xy = jnp.asarray(np.stack([tx[ob_idx], ty[ob_idx]], axis=-1))
        t_wh = jnp.asarray(np.stack([tw[ob_idx], th[ob_idx]], axis=-1))
        t_cl = jnp.asarray(tcls[ob_idx])                     # (No, NC)

        sig_xy = jax.nn.sigmoid(p_cell[:, 0:2])
        loss = loss + LAMBDA_XY * jnp.sum((sig_xy - t_xy) ** 2)
        loss = loss + LAMBDA_WH * jnp.sum((p_cell[:, 2:4] - t_wh) ** 2)
        # -log(sigmoid(p)) == softplus(-p)
        loss = loss + LAMBDA_CONF * jnp.sum(_sp_clamped(-p_cell[:, 4]))
        p_cls = p_cell[:, 5:]
        bce_cls = (t_cl * _sp_clamped(-p_cls)
                   + (1.0 - t_cl) * _sp_clamped(p_cls))
        loss = loss + LAMBDA_CLS * jnp.sum(bce_cls)

    return loss


# ----------------------------------------------------------------------------
# Pure numpy reference (mirrors the PyTorch forward) for a correctness check.
# ----------------------------------------------------------------------------
def reference_loss(pred, target, cfg, anchors):
    B, _, H, W = pred.shape
    A = len(anchors)
    NC = cfg["classes"]
    attrs = 5 + NC
    stride_h = cfg["input_size"] / H
    stride_w = cfg["input_size"] / W
    scaled_anchors = [(aw / stride_w, ah / stride_h) for aw, ah in anchors]

    prediction = pred.reshape(B, A, attrs, H, W).transpose(0, 1, 3, 4, 2)
    sig = 1.0 / (1.0 + np.exp(-prediction))
    x, y = sig[..., 0], sig[..., 1]
    w, h = prediction[..., 2], prediction[..., 3]
    conf, pcls = sig[..., 4], sig[..., 5:]

    mask, noobj, tx, ty, tw, th, tconf, tcls = encode_target_np(
        target, scaled_anchors, W, H, IGNORE_THRESHOLD, A, NC)

    with np.errstate(divide="ignore"):
        def logc(v):
            return np.maximum(np.log(v), -100.0)

        def bce_sum(p, t):
            return np.sum(-(t * logc(p) + (1.0 - t) * logc(1.0 - p)))

        mse = lambda a, b: np.sum((a - b) ** 2)
        lx = mse(x * mask, tx * mask)
        ly = mse(y * mask, ty * mask)
        lw = mse(w * mask, tw * mask)
        lh = mse(h * mask, th * mask)
        lconf = bce_sum(conf * mask, mask) + 0.5 * bce_sum(conf * noobj, noobj * 0.0)
        sel = mask == 1
        lcls = bce_sum(pcls[sel], tcls[sel])
    return (lx * LAMBDA_XY + ly * LAMBDA_XY + lw * LAMBDA_WH + lh * LAMBDA_WH
            + lconf * LAMBDA_CONF + lcls * LAMBDA_CLS)


if __name__ == "__main__":
    cfg = {"classes": 3, "input_size": 128}
    branch_anchors = [(10.0, 13.0), (16.0, 30.0), (33.0, 23.0)]
    B, H, W = 2, 16, 16
    A = len(branch_anchors)
    NC = cfg["classes"]
    attrs = 5 + NC

    key = jax.random.PRNGKey(0)
    pred = jax.random.normal(key, (B, A * attrs, H, W), dtype=jnp.float32)

    # target: (B, num_boxes, 5) = normalized (cx, cy, w, h, class); zero rows = padding
    target = np.zeros((B, 4, 5), np.float32)
    target[0, 0] = [0.30, 0.40, 0.20, 0.30, 1]
    target[0, 1] = [0.70, 0.60, 0.10, 0.15, 0]
    target[1, 0] = [0.50, 0.50, 0.40, 0.35, 2]
    target[1, 1] = [0.15, 0.80, 0.05, 0.08, 1]

    loss = yolo_loss_pallas(pred, target, cfg, branch_anchors)
    loss = jax.block_until_ready(loss)

    ref = reference_loss(np.asarray(pred, np.float64), target, cfg, branch_anchors)
    assert np.isfinite(float(loss))
    assert np.allclose(float(loss), float(ref), rtol=1e-3, atol=1e-2), (float(loss), float(ref))
    print("KERNEL_OK")
</pallas_src>

<mosaic_0001>
module attributes {stable_mosaic.version = 11 : i64} {
  func.func @_noobj_conf_kernel(%arg0: i32, %arg1: i32, %arg2: memref<16x128xf32, #tpu.memory_space<vmem>>, %arg3: memref<8x128xf32, #tpu.memory_space<vmem>>) attributes {dimension_semantics = [#tpu.dimension_semantics<parallel>, #tpu.dimension_semantics<arbitrary>], iteration_bounds = array<i64: 1, 1>, scalar_prefetch = 0 : i64, scratch_operands = 0 : i64, tpu.core_type = #tpu.core_type<tc>, window_params = [{transform_indices = @transform_0, window_bounds = array<i64: 16, 128>}, {transform_indices = @transform_1, window_bounds = array<i64: 8, 128>}]} {
    %c0_i32 = arith.constant 0 : i32
    %0 = arith.cmpi eq, %arg1, %c0_i32 : i32
    %1 = arith.extui %0 : i1 to i32
    %c0_i32_0 = arith.constant 0 : i32
    %2 = arith.cmpi ne, %1, %c0_i32_0 : i32
    scf.if %2 {
      %cst_11 = arith.constant 0.000000e+00 : f32
      %23 = vector.broadcast %cst_11 : f32 to vector<8x128xf32>
      %c0_12 = arith.constant 0 : index
      %c0_13 = arith.constant 0 : index
      %24 = vector.load %arg3[%c0_12, %c0_13] : memref<8x128xf32, #tpu.memory_space<vmem>>, vector<8x128xf32>
      tpu.vector_store %arg3[%c0_12, %c0_13], %23 {strides = array<i32>} : memref<8x128xf32, #tpu.memory_space<vmem>>, vector<8x128xf32>,
    } else {
    }
    %c0 = arith.constant 0 : index
    %c0_1 = arith.constant 0 : index
    %3 = vector.load %arg2[%c0, %c0_1] : memref<16x128xf32, #tpu.memory_space<vmem>>, vector<16x128xf32>
    %cst = arith.constant 0.000000e+00 : f32
    %4 = vector.broadcast %cst : f32 to vector<16x128xf32>
    %5 = arith.maximumf %3, %4 : vector<16x128xf32>
    %6 = math.absf %3 : vector<16x128xf32>
    %cst_2 = arith.constant 0.000000e+00 : f32
    %7 = vector.broadcast %cst_2 : f32 to vector<16x128xf32>
    %8 = arith.subf %7, %6 : vector<16x128xf32>
    %9 = math.exp %8 : vector<16x128xf32>
    %cst_3 = arith.constant 1.000000e+00 : f32
    %10 = vector.broadcast %cst_3 : f32 to vector<16x128xf32>
    %11 = arith.addf %10, %9 : vector<16x128xf32>
    %12 = math.log %11 : vector<16x128xf32>
    %13 = arith.addf %5, %12 : vector<16x128xf32>
    %cst_4 = arith.constant 1.000000e+02 : f32
    %14 = vector.broadcast %cst_4 : f32 to vector<16x128xf32>
    %15 = arith.minimumf %13, %14 : vector<16x128xf32>
    %cst_5 = arith.constant 5.000000e-01 : f32
    %16 = vector.broadcast %cst_5 : f32 to vector<16x128xf32>
    %17 = arith.mulf %16, %15 : vector<16x128xf32>
    %18 = vector.shape_cast %17 : vector<16x128xf32> to vector<2x8x128xf32>
    %cst_6 = arith.constant dense<0.000000e+00> : vector<8x128xf32>
    %19 = vector.multi_reduction <add>, %18, %cst_6 [0] : vector<2x8x128xf32> to vector<8x128xf32>
    %c0_7 = arith.constant 0 : index
    %c0_8 = arith.constant 0 : index
    %20 = vector.load %arg3[%c0_7, %c0_8] : memref<8x128xf32, #tpu.memory_space<vmem>>, vector<8x128xf32>
    %21 = arith.addf %20, %19 : vector<8x128xf32>
    %c0_9 = arith.constant 0 : index
    %c0_10 = arith.constant 0 : index
    %22 = vector.load %arg3[%c0_9, %c0_10] : memref<8x128xf32, #tpu.memory_space<vmem>>, vector<8x128xf32>
    tpu.vector_store %arg3[%c0_9, %c0_10], %21 {strides = array<i32>} : memref<8x128xf32, #tpu.memory_space<vmem>>, vector<8x128xf32>,
    return
  }
  func.func @transform_0(%arg0: i32, %arg1: i32) -> (i32, i32) {
    %c1_i32 = arith.constant 1 : i32
    %0 = arith.muli %arg0, %c1_i32 : i32
    %1 = arith.addi %0, %arg1 : i32
    %c0_i32 = arith.constant 0 : i32
    %c0_i32_0 = arith.constant 0 : i32
    return %1, %c0_i32 : i32, i32
  }
  func.func @transform_1(%arg0: i32, %arg1: i32) -> (i32, i32) {
    %c0_i32 = arith.constant 0 : i32
    %c0_i32_0 = arith.constant 0 : i32
    return %arg0, %c0_i32 : i32, i32
  }
}

</mosaic_0001>

<llo_original>
// kernel: tpu_custom_call.1
$region0: #{tpu_custom_call.1}
  #allocation0 [shape = 'u32[]', space=smem, size = 0x4, offset = 0x4, fixed_abs, tag = 'smem constant byte address 0x4 - core index']
  #allocation1 [shape = 'u32[72,128]{1,0:T(1,128)}', space=vmem, size = 0x9000, scoped, tag = 'internal scratch']
  %s0 = inlined_call_operand.hbm [shape: f32[16,128], index: 0, kind: input, shape index: {}]
  %s1 = inlined_call_operand.hbm [shape: f32[8,128], index: 1, kind: output, shape index: {}]
  %s2 = sld [smem:[#allocation0]]
  $region22: #{tpu_custom_call.1} parent=0
    _
  %s4 = ssub.s32 1, %s2
  %s5 = scalar_select 0, %s4, %s2
  $region1: #{tpu_custom_call.1} parent=0
    #allocation2 [shape = 'u8[8192]{0}', space=vmem, size = 0x2000, scoped, tag = 'input window, operand 0, single buffered']
    #allocation3 [shape = 's32[1]{0}', space=sflag, size = 0x4, scoped, tag = 'scoped memory for tpu_custom_call.1']
    #allocation4 [shape = 's32[1]{0}', space=sflag, size = 0x4, scoped, tag = 'scoped memory for tpu_custom_call.1']
    #allocation5 [shape = 'u8[4096]{0}', space=vmem, size = 0x1000, scoped, tag = 'output window, operand 0, single buffered']
    %6 = vsyncpa [#allocation3], 0
    %7 = vsyncpa [#allocation4], 0
    // Predicated region
    $region2: #{tpu_custom_call.1} parent=1 // pred_check
      _
    $region3: #{tpu_custom_call.1} parent=1 // pred_check_branch
      %9 = sbr.rel (0) target = $region5
    $region4: #{tpu_custom_call.1} parent=1 // pred_region
      %s10 = sadd.s32 0, 0
      %s11 = smul.u32 2, %s10
      %13 = vsyncadd [#allocation3], 0
      %s14 = smul.addr %s11, 8
      %s15 = scalar_lea.hbm %s0, %s14
      %s16 = sshll.u32 %s15, 4
      %s17 = int_to_ptr.hbm [resolvable:$true] %s16
      %s18 = sshll.u32 [#allocation2], 4
      %s19 = int_to_ptr.vmem [resolvable:$true] %s18
      %24 = dma.hbm_to_vmem [thread:$0]  %s17, 256, %s19, [#allocation3], 128, 128, 8
    $region5: #{tpu_custom_call.1} parent=1 // pred_fallthru
      _
    // Predicated region
    $region6: #{tpu_custom_call.1} parent=1 // pred_check
      _
    $region7: #{tpu_custom_call.1} parent=1 // pred_check_branch
      %26 = sbr.rel (0) target = $region9
    $region8: #{tpu_custom_call.1} parent=1 // pred_region
      %28 = dma.done [#allocation3], 256
    $region9: #{tpu_custom_call.1} parent=1 // pred_fallthru
      _
    %s29 = sadd.s32 0, 0
    %s30 = smul.u32 2, %s29
    %p31 = scmp.eq.s32.totalorder 0, 0
    // Predicated region
    $region10: #{tpu_custom_call.1} parent=1 // pred_check
      %p32 = pneg %p31
    $region11: #{tpu_custom_call.1} parent=1 // pred_check_branch
      %34 = sbr.rel (%p32) target = $region13
    $region12: #{tpu_custom_call.1} parent=1 // pred_region
      %35 = vst [vmem:[#allocation5] sm:$0xff] 0.0
    $region13: #{tpu_custom_call.1} parent=1 // pred_fallthru
      _
    %v36 = vld [vmem:[#allocation2] sm:$0xff]
    %v37 = vld [vmem:[#allocation2 + $0x8] sm:$0xff]
    %v38 = vmax.f32 %v36, 0.0
    %v39 = vmax.f32 %v37, 0.0
    %v40 = vand.u32 2147483647, %v36
    %v41 = vand.u32 2147483647, %v37
    %v42 = vsub.f32 0.0, %v40
    %v43 = vsub.f32 0.0, %v41
    %v44 = vmul.f32 %v42, 1.442695
    %v45 = vpow.pop %v44
    %v46 = vmul.f32 %v43, 1.442695
    %v47 = vpow.pop %v46
    %v48 = vadd.f32 %v45, 1.0
    %v49 = vadd.f32 %v47, 1.0
    %v50 = vlog2.pop %v48
    %v51 = vmul.f32 %v50, 0.6931472
    %v52 = vlog2.pop %v49
    %v53 = vmul.f32 %v52, 0.6931472
    %v54 = vadd.f32 %v38, %v51
    %v55 = vadd.f32 %v39, %v53
    %v56 = vmin.f32 %v54, 100.0
    %v57 = vmin.f32 %v55, 100.0
    %v58 = vmul.f32 %v56, 0.5
    %v59 = vmul.f32 %v57, 0.5
    %v60 = vadd.f32 %v58, %v59
    %v61 = vld [vmem:[#allocation5] sm:$0xff]
    %v62 = vadd.f32 %v61, %v60
    %63 = vst [vmem:[#allocation5] sm:$0xff] %v62
    // Predicated region
    $region14: #{tpu_custom_call.1} parent=1 // pred_check
      _
    $region15: #{tpu_custom_call.1} parent=1 // pred_check_branch
      %65 = sbr.rel (0) target = $region17
    $region16: #{tpu_custom_call.1} parent=1 // pred_region
      %67 = vsyncadd [#allocation4], 0
      %s69 = sshll.u32 [#allocation5], 4
      %s70 = int_to_ptr.vmem [resolvable:$true] %s69
      %s71 = sshll.u32 %s1, 4
      %s72 = int_to_ptr.hbm [resolvable:$true] %s71
      %74 = dma.vmem_to_hbm [thread:$0]  %s70, 128, %s72, [#allocation4]
    $region17: #{tpu_custom_call.1} parent=1 // pred_fallthru
      _
    // Predicated region
    $region18: #{tpu_custom_call.1} parent=1 // pred_check
      _
    $region19: #{tpu_custom_call.1} parent=1 // pred_check_branch
      %76 = sbr.rel (0) target = $region21
    $region20: #{tpu_custom_call.1} parent=1 // pred_region
      %78 = dma.done [#allocation4], 128
    $region21: #{tpu_custom_call.1} parent=1 // pred_fallthru
      _
    %79 = vsyncpa [#allocation3], 1
    %80 = vsyncpa [#allocation4], 1

</llo_original>
